<compile_context>
chip_gen: v7x
topology: tpu7x:2x2x1
jax: 0.10.0
libtpu: 0.0.40
codegen_flags: <defaults>
</compile_context>

<pallas_src>
import functools

import jax
import jax.numpy as jnp
from jax import lax
from jax.experimental import pallas as pl
from jax.experimental.pallas import tpu as pltpu


_LANES = 128      # vreg lane width
_ACC_ROWS = 32    # 4 independent 8-sublane accumulator chains (VPU headroom on v7x)


def _round_up(x, m):
    return (x + m - 1) // m * m


def _num_tensorcores():
    """Best-effort TensorCores-per-device count (v7x / megacore -> 2). Perf-only hint."""
    try:
        info = pltpu.get_tpu_info()
        for attr in ("num_tensorcores", "tensorcore_count", "num_cores", "core_count"):
            v = getattr(info, attr, None)
            if v is not None:
                try:
                    v = int(v)
                except Exception:
                    continue
                if v >= 1:
                    return v
    except Exception:
        pass
    try:
        kind = jax.devices()[0].device_kind.lower().replace(" ", "")
        if ("v7" in kind) or ("v4" in kind) or ("v5p" in kind):
            return 2
    except Exception:
        pass
    return 1


def _focal_loss_elements(x, y, gamma, alpha):
    """Elementwise focal BCE-with-logits in f32 (shared by the kernel and the JAX tail)."""
    x = x.astype(jnp.float32)
    y = y.astype(jnp.float32)
    # Stable softplus: sp = log1p(exp(-|x|)); then
    #   log(sigmoid(x))     = min(x, 0) - sp
    #   log(1 - sigmoid(x)) = log(sigmoid(x)) - x
    #   sigmoid(x)          = exp(log(sigmoid(x)))
    sp = jnp.log1p(jnp.exp(-jnp.abs(x)))
    log_probs = jnp.minimum(x, 0.0) - sp
    log_1_probs = log_probs - x
    probs = jnp.exp(log_probs)

    d = y - probs
    if float(gamma) == 2.0:
        coeff = -(d * d)                # default path: one VPU multiply, no float pow
    elif float(gamma) == 1.0:
        coeff = -jnp.abs(d)
    else:
        coeff = -(jnp.abs(d) ** gamma)  # general (non-integer) gamma keeps pow

    loss = (alpha * y) * log_probs + ((1.0 - alpha) * (1.0 - y)) * log_1_probs
    return loss * coeff


def _focal_bce_kernel(x_ref, y_ref, out_ref, acc_ref, *,
                      gamma, alpha, rows, tile_rows, lanes, steps, last_block, needs_mask):
    c = pl.program_id(0)   # TensorCore shard (parallel axis)
    i = pl.program_id(1)   # reduction step within the shard (arbitrary axis)

    @pl.when(i == 0)
    def _():
        acc_ref[...] = jnp.zeros_like(acc_ref)

    loss = _focal_loss_elements(x_ref[...], y_ref[...], gamma, alpha)

    def _accumulate(vals):
        # (tile_rows, lanes) -> (tile_rows//32, 32, lanes); sum over the leading axis.
        # Pure lane-parallel VPU adds into 4 independent 8-sublane accumulator chains;
        # no cross-lane work until the epilogue.
        partial = jnp.sum(vals.reshape(tile_rows // _ACC_ROWS, _ACC_ROWS, lanes), axis=0)
        acc_ref[...] = acc_ref[...] + partial

    if needs_mask:
        g = c * steps + i                 # unclamped global block index
        is_edge = g >= last_block         # ragged last block or phantom megacore block

        @pl.when(is_edge)
        def _():
            # Row-granular mask: no flat element index, so no int32 overflow even for
            # multi-billion-element inputs. Phantom blocks (g > last_block) mask to zero.
            row_ids = lax.broadcasted_iota(jnp.int32, (tile_rows, lanes), 0)
            valid = (g * tile_rows + row_ids) < rows
            _accumulate(jnp.where(valid, loss, 0.0))

        @pl.when(jnp.logical_not(is_edge))
        def _():
            _accumulate(loss)
    else:
        _accumulate(loss)

    @pl.when(i == steps - 1)
    def _():
        # Single cross-lane reduction, once per core.
        out_ref[...] = jnp.sum(acc_ref[...], keepdims=True)


def bce_focal_loss_with_logits(logits, label, gamma=2.0, alpha=0.5, reduction="mean",
                               tile_rows=None, lanes=_LANES):
    """Pallas equivalent of BCE_FocalLoss_withLogits.forward (reduction='mean'/'sum')."""
    assert logits.shape == label.shape
    n = int(logits.size)
    assert n > 0

    x_flat = jnp.ravel(logits)
    y_flat = jnp.ravel(label)

    rows = n // lanes          # lane-aligned rows handled by the kernel
    tail = n - rows * lanes    # <=127 leftover elements handled in plain JAX (no full pad copy)

    parts = []

    if rows > 0:
        if tail == 0:
            x2 = x_flat.reshape(rows, lanes)       # free (contiguous) reshape
            y2 = y_flat.reshape(rows, lanes)
        else:
            x2 = lax.slice(x_flat, (0,), (rows * lanes,)).reshape(rows, lanes)
            y2 = lax.slice(y_flat, (0,), (rows * lanes,)).reshape(rows, lanes)

        # Block size: dtype-aware, ~2 MiB of the widest input per grid step
        # (tile_rows=4096 for f32, 8192 for bf16), rounded to the 32-row accumulator chunk.
        if tile_rows is None:
            widest = max(x2.dtype.itemsize, y2.dtype.itemsize)
            tile_rows = max(_ACC_ROWS, (2 * 2**20) // (lanes * widest))
        tile_rows = _round_up(max(1, min(int(tile_rows), rows)), _ACC_ROWS)

        # VMEM budget: stay well under every generation's physical per-TC VMEM
        # (64 MiB cap on v5e/v6e's 128 MiB; 48 MiB on v7x's 64 MiB).
        try:
            phys_vmem = int(getattr(pltpu.get_tpu_info(), "vmem_capacity_bytes", 128 * 2**20))
        except Exception:
            phys_vmem = 64 * 2**20
        vmem_cap = min(64 * 2**20, (phys_vmem * 3) // 4)

        # Clamp tile_rows so 2 inputs x 2 pipeline buffers fit with headroom.
        per_row_bytes = lanes * (x2.dtype.itemsize + y2.dtype.itemsize)
        max_tile_rows = max(_ACC_ROWS,
                            ((vmem_cap // 2) // (2 * per_row_bytes)) // _ACC_ROWS * _ACC_ROWS)
        tile_rows = min(tile_rows, max_tile_rows)

        total_blocks = pl.cdiv(rows, tile_rows)
        # Megacore sharding: always split when the block count is even (harmless no-op on
        # single-TC chips); for odd counts split only if the device has >= 2 TensorCores
        # (v7x), paying one masked phantom block on core 1 instead of forfeiting ~2x BW.
        if total_blocks >= 2 and (total_blocks % 2 == 0 or _num_tensorcores() >= 2):
            num_cores = 2
        else:
            num_cores = 1
        steps = pl.cdiv(total_blocks, num_cores)
        last_block = total_blocks - 1
        covered_rows = num_cores * steps * tile_rows
        needs_mask = covered_rows != rows

        if num_cores * steps > total_blocks:
            def _in_index(c, i):
                # Clamp phantom blocks onto the last real block; their contribution is masked.
                return (jnp.minimum(c * steps + i, last_block), 0)
        else:
            def _in_index(c, i):
                return (c * steps + i, 0)

        in_spec = pl.BlockSpec((tile_rows, lanes), _in_index)

        block_bytes = tile_rows * per_row_bytes
        vmem_limit = int(min(vmem_cap, max(16 * 2**20, 4 * block_bytes)))

        kernel = functools.partial(
            _focal_bce_kernel, gamma=float(gamma), alpha=float(alpha), rows=rows,
            tile_rows=tile_rows, lanes=lanes, steps=steps,
            last_block=last_block, needs_mask=needs_mask)

        partials = pl.pallas_call(
            kernel,
            out_shape=jax.ShapeDtypeStruct((num_cores, 1), jnp.float32),
            grid_spec=pltpu.PrefetchScalarGridSpec(
                num_scalar_prefetch=0,
                grid=(num_cores, steps),
                in_specs=[in_spec, in_spec],
                out_specs=pl.BlockSpec((1, 1), lambda c, i: (c, 0)),
                scratch_shapes=[pltpu.VMEM((_ACC_ROWS, lanes), jnp.float32)],
            ),
            compiler_params=pltpu.CompilerParams(
                dimension_semantics=("parallel", "arbitrary"),
                vmem_limit_bytes=vmem_limit),
        )(x2, y2)
        parts.append(jnp.sum(partials))

    if tail > 0:
        # <=127 trailing elements: negligible work, done in plain JAX so unaligned sizes
        # never trigger a padded full-array copy.
        x_t = lax.slice(x_flat, (rows * lanes,), (n,))
        y_t = lax.slice(y_flat, (rows * lanes,), (n,))
        parts.append(jnp.sum(_focal_loss_elements(x_t, y_t, float(gamma), float(alpha))))

    total = parts[0] if len(parts) == 1 else parts[0] + parts[1]

    if reduction == "mean":
        return total / jnp.float32(n)
    if reduction == "sum":
        return total
    # TODO(synk): reduction='none' (returning the unreduced elementwise map) is not implemented.
    raise NotImplementedError("reduction must be 'mean' or 'sum'")


def _reference(logits, label, gamma=2.0, alpha=0.5, reduction="mean"):
    x = logits.astype(jnp.float32)
    y = label.astype(jnp.float32)
    probs = jax.nn.sigmoid(x)
    coeff = -(jnp.abs(y - probs) ** gamma)
    log_probs = jnp.where(x >= 0, -jnp.log1p(jnp.exp(-x)), x - jnp.log1p(jnp.exp(x)))
    log_1_probs = jnp.where(x >= 0, -x - jnp.log1p(jnp.exp(-x)), -jnp.log1p(jnp.exp(x)))
    loss = y * alpha * log_probs + (1.0 - y) * (1.0 - alpha) * log_1_probs
    loss = loss * coeff
    return jnp.mean(loss) if reduction == "mean" else jnp.sum(loss)


if __name__ == "__main__":
    k1, k2, k3, k4, k5, k6 = jax.random.split(jax.random.PRNGKey(0), 6)

    # Case 1: lane-aligned (B, C, H, W), mean reduction (module default).
    logits1 = jax.random.normal(k1, (2, 4, 16, 16), dtype=jnp.float32)
    labels1 = jax.random.randint(k2, (2, 4, 16, 16), 0, 2).astype(jnp.float32)
    out1 = jax.block_until_ready(
        bce_focal_loss_with_logits(logits1, labels1, gamma=2.0, alpha=0.5, reduction="mean"))
    ref1 = _reference(logits1, labels1)
    assert jnp.allclose(out1, ref1, rtol=1e-5, atol=1e-6), (out1, ref1)

    # Case 2: ragged element count (n % 128 != 0) + sum reduction -> kernel prefix + JAX tail.
    logits2 = jax.random.normal(k3, (3, 5, 7, 11), dtype=jnp.float32)
    labels2 = jax.random.randint(k4, (3, 5, 7, 11), 0, 2).astype(jnp.float32)
    out2 = jax.block_until_ready(
        bce_focal_loss_with_logits(logits2, labels2, reduction="sum"))
    ref2 = _reference(logits2, labels2, reduction="sum")
    assert jnp.allclose(out2, ref2, rtol=1e-5, atol=1e-5), (out2, ref2)

    # Case 3: odd block count (tile_rows=32, 80 rows -> 3 blocks) with bf16 labels:
    # exercises the 2-core split / phantom-block masking and the mixed-dtype path.
    logits3 = jax.random.normal(k5, (1, 5, 16, 128), dtype=jnp.float32)
    labels3 = jax.random.randint(k6, (1, 5, 16, 128), 0, 2).astype(jnp.bfloat16)
    out3 = jax.block_until_ready(
        bce_focal_loss_with_logits(logits3, labels3, tile_rows=32))
    ref3 = _reference(logits3, labels3)
    assert jnp.allclose(out3, ref3, rtol=1e-5, atol=1e-6), (out3, ref3)

    print("KERNEL_OK")
</pallas_src>

<mosaic_0001>
module attributes {stable_mosaic.version = 11 : i64} {
  func.func @_focal_bce_kernel(%arg0: i32, %arg1: i32, %arg2: memref<32x128xf32, #tpu.memory_space<vmem>>, %arg3: memref<32x128xf32, #tpu.memory_space<vmem>>, %arg4: memref<1x1xf32, #tpu.memory_space<vmem>>, %arg5: memref<32x128xf32, #tpu.memory_space<vmem>>) attributes {dimension_semantics = [#tpu.dimension_semantics<parallel>, #tpu.dimension_semantics<arbitrary>], iteration_bounds = array<i64: 1, 1>, scalar_prefetch = 0 : i64, scratch_operands = 1 : i64, tpu.core_type = #tpu.core_type<tc>, window_params = [{transform_indices = @transform_0, window_bounds = array<i64: 32, 128>}, {transform_indices = @transform_1, window_bounds = array<i64: 32, 128>}, {transform_indices = @transform_2, window_bounds = array<i64: 1, 1>}]} {
    %c0_i32 = arith.constant 0 : i32
    %0 = arith.cmpi eq, %arg1, %c0_i32 : i32
    %1 = arith.extui %0 : i1 to i32
    %c0_i32_0 = arith.constant 0 : i32
    %2 = arith.cmpi ne, %1, %c0_i32_0 : i32
    scf.if %2 {
      %cst_14 = arith.constant 0.000000e+00 : f32
      %40 = vector.broadcast %cst_14 : f32 to vector<32x128xf32>
      %c0_15 = arith.constant 0 : index
      %c0_16 = arith.constant 0 : index
      %41 = vector.load %arg5[%c0_15, %c0_16] : memref<32x128xf32, #tpu.memory_space<vmem>>, vector<32x128xf32>
      tpu.vector_store %arg5[%c0_15, %c0_16], %40 {strides = array<i32>} : memref<32x128xf32, #tpu.memory_space<vmem>>, vector<32x128xf32>,
    } else {
    }
    %c0 = arith.constant 0 : index
    %c0_1 = arith.constant 0 : index
    %3 = vector.load %arg2[%c0, %c0_1] : memref<32x128xf32, #tpu.memory_space<vmem>>, vector<32x128xf32>
    %c0_2 = arith.constant 0 : index
    %c0_3 = arith.constant 0 : index
    %4 = vector.load %arg3[%c0_2, %c0_3] : memref<32x128xf32, #tpu.memory_space<vmem>>, vector<32x128xf32>
    %5 = math.absf %3 : vector<32x128xf32>
    %cst = arith.constant 0.000000e+00 : f32
    %6 = vector.broadcast %cst : f32 to vector<32x128xf32>
    %7 = arith.subf %6, %5 : vector<32x128xf32>
    %8 = math.exp %7 : vector<32x128xf32>
    %9 = math.log1p %8 : vector<32x128xf32>
    %cst_4 = arith.constant 0.000000e+00 : f32
    %10 = vector.broadcast %cst_4 : f32 to vector<32x128xf32>
    %11 = arith.minimumf %3, %10 : vector<32x128xf32>
    %12 = arith.subf %11, %9 : vector<32x128xf32>
    %13 = arith.subf %12, %3 : vector<32x128xf32>
    %14 = math.exp %12 : vector<32x128xf32>
    %15 = arith.subf %4, %14 : vector<32x128xf32>
    %16 = arith.mulf %15, %15 : vector<32x128xf32>
    %cst_5 = arith.constant 0.000000e+00 : f32
    %17 = vector.broadcast %cst_5 : f32 to vector<32x128xf32>
    %18 = arith.subf %17, %16 : vector<32x128xf32>
    %cst_6 = arith.constant 5.000000e-01 : f32
    %19 = vector.broadcast %cst_6 : f32 to vector<32x128xf32>
    %20 = arith.mulf %19, %4 : vector<32x128xf32>
    %21 = arith.mulf %20, %12 : vector<32x128xf32>
    %cst_7 = arith.constant 1.000000e+00 : f32
    %22 = vector.broadcast %cst_7 : f32 to vector<32x128xf32>
    %23 = arith.subf %22, %4 : vector<32x128xf32>
    %cst_8 = arith.constant 5.000000e-01 : f32
    %24 = vector.broadcast %cst_8 : f32 to vector<32x128xf32>
    %25 = arith.mulf %24, %23 : vector<32x128xf32>
    %26 = arith.mulf %25, %13 : vector<32x128xf32>
    %27 = arith.addf %21, %26 : vector<32x128xf32>
    %28 = arith.mulf %27, %18 : vector<32x128xf32>
    %c1_i32 = arith.constant 1 : i32
    %29 = arith.muli %arg0, %c1_i32 : i32
    %30 = arith.addi %29, %arg1 : i32
    %c0_i32_9 = arith.constant 0 : i32
    %31 = arith.cmpi sge, %30, %c0_i32_9 : i32
    %32 = arith.extui %31 : i1 to i32
    %c0_i32_10 = arith.constant 0 : i32
    %33 = arith.cmpi ne, %32, %c0_i32_10 : i32
    scf.if %33 {
      %40 = tpu.iota {dimensions = array<i32: 0>} : vector<32x128xi32>
      %c32_i32 = arith.constant 32 : i32
      %41 = arith.muli %30, %c32_i32 : i32
      %42 = vector.broadcast %41 : i32 to vector<32x128xi32>
      %43 = arith.addi %42, %40 : vector<32x128xi32>
      %c16_i32 = arith.constant 16 : i32
      %44 = vector.broadcast %c16_i32 : i32 to vector<32x128xi32>
      %45 = arith.cmpi slt, %43, %44 : vector<32x128xi32>
      %cst_14 = arith.constant 0.000000e+00 : f32
      %46 = vector.broadcast %cst_14 : f32 to vector<32x128xf32>
      %47 = arith.select %45, %28, %46 : vector<32x128xi1>, vector<32x128xf32>
      %48 = vector.shape_cast %47 : vector<32x128xf32> to vector<1x32x128xf32>
      %cst_15 = arith.constant dense<0.000000e+00> : vector<32x128xf32>
      %49 = vector.multi_reduction <add>, %48, %cst_15 [0] : vector<1x32x128xf32> to vector<32x128xf32>
      %c0_16 = arith.constant 0 : index
      %c0_17 = arith.constant 0 : index
      %50 = vector.load %arg5[%c0_16, %c0_17] : memref<32x128xf32, #tpu.memory_space<vmem>>, vector<32x128xf32>
      %51 = arith.addf %50, %49 : vector<32x128xf32>
      %c0_18 = arith.constant 0 : index
      %c0_19 = arith.constant 0 : index
      %52 = vector.load %arg5[%c0_18, %c0_19] : memref<32x128xf32, #tpu.memory_space<vmem>>, vector<32x128xf32>
      tpu.vector_store %arg5[%c0_18, %c0_19], %51 {strides = array<i32>} : memref<32x128xf32, #tpu.memory_space<vmem>>, vector<32x128xf32>,
    } else {
    }
    %true = arith.constant true
    %34 = arith.xori %31, %true : i1
    %35 = arith.extui %34 : i1 to i32
    %c0_i32_11 = arith.constant 0 : i32
    %36 = arith.cmpi ne, %35, %c0_i32_11 : i32
    scf.if %36 {
      %40 = vector.shape_cast %28 : vector<32x128xf32> to vector<1x32x128xf32>
      %cst_14 = arith.constant dense<0.000000e+00> : vector<32x128xf32>
      %41 = vector.multi_reduction <add>, %40, %cst_14 [0] : vector<1x32x128xf32> to vector<32x128xf32>
      %c0_15 = arith.constant 0 : index
      %c0_16 = arith.constant 0 : index
      %42 = vector.load %arg5[%c0_15, %c0_16] : memref<32x128xf32, #tpu.memory_space<vmem>>, vector<32x128xf32>
      %43 = arith.addf %42, %41 : vector<32x128xf32>
      %c0_17 = arith.constant 0 : index
      %c0_18 = arith.constant 0 : index
      %44 = vector.load %arg5[%c0_17, %c0_18] : memref<32x128xf32, #tpu.memory_space<vmem>>, vector<32x128xf32>
      tpu.vector_store %arg5[%c0_17, %c0_18], %43 {strides = array<i32>} : memref<32x128xf32, #tpu.memory_space<vmem>>, vector<32x128xf32>,
    } else {
    }
    %c0_i32_12 = arith.constant 0 : i32
    %37 = arith.cmpi eq, %arg1, %c0_i32_12 : i32
    %38 = arith.extui %37 : i1 to i32
    %c0_i32_13 = arith.constant 0 : i32
    %39 = arith.cmpi ne, %38, %c0_i32_13 : i32
    scf.if %39 {
      %c0_14 = arith.constant 0 : index
      %c0_15 = arith.constant 0 : index
      %40 = vector.load %arg5[%c0_14, %c0_15] : memref<32x128xf32, #tpu.memory_space<vmem>>, vector<32x128xf32>
      %41 = vector.shape_cast %40 : vector<32x128xf32> to vector<1x32x128xf32>
      %cst_16 = arith.constant dense<0.000000e+00> : vector<1xf32>
      %42 = vector.multi_reduction <add>, %41, %cst_16 [1, 2] : vector<1x32x128xf32> to vector<1xf32>
      %43 = vector.shape_cast %42 : vector<1xf32> to vector<1x1x1xf32>
      %44 = vector.extract %43[0, 0, 0] : f32 from vector<1x1x1xf32>
      %45 = vector.broadcast %44 : f32 to vector<1x1xf32>
      %c0_17 = arith.constant 0 : index
      %c0_18 = arith.constant 0 : index
      %46 = vector.load %arg4[%c0_17, %c0_18] : memref<1x1xf32, #tpu.memory_space<vmem>>, vector<1x1xf32>
      tpu.vector_store %arg4[%c0_17, %c0_18], %45 {strides = array<i32>} : memref<1x1xf32, #tpu.memory_space<vmem>>, vector<1x1xf32>,
    } else {
    }
    return
  }
  func.func @transform_0(%arg0: i32, %arg1: i32) -> (i32, i32) {
    %c1_i32 = arith.constant 1 : i32
    %0 = arith.muli %arg0, %c1_i32 : i32
    %1 = arith.addi %0, %arg1 : i32
    %c0_i32 = arith.constant 0 : i32
    %c0_i32_0 = arith.constant 0 : i32
    return %1, %c0_i32 : i32, i32
  }
  func.func @transform_1(%arg0: i32, %arg1: i32) -> (i32, i32) {
    %c1_i32 = arith.constant 1 : i32
    %0 = arith.muli %arg0, %c1_i32 : i32
    %1 = arith.addi %0, %arg1 : i32
    %c0_i32 = arith.constant 0 : i32
    %c0_i32_0 = arith.constant 0 : i32
    return %1, %c0_i32 : i32, i32
  }
  func.func @transform_2(%arg0: i32, %arg1: i32) -> (i32, i32) {
    %c0_i32 = arith.constant 0 : i32
    %c0_i32_0 = arith.constant 0 : i32
    return %arg0, %c0_i32 : i32, i32
  }
}

</mosaic_0001>

<llo_original>
// kernel: tpu_custom_call.1
$region0: #{tpu_custom_call.1}
  #allocation0 [shape = 'u32[]', space=smem, size = 0x4, offset = 0x4, fixed_abs, tag = 'smem constant byte address 0x4 - core index']
  #allocation1 [shape = 'u32[144,128]{1,0:T(1,128)}', space=vmem, size = 0x12000, scoped, tag = 'internal scratch']
  #allocation2 [shape = 'f32[32,128]{1,0:T(8,128)}', space=vmem, size = 0x4000, scoped, tag = 'scratch operand']
  %s0 = inlined_call_operand.hbm [shape: f32[16,128], index: 0, kind: input, shape index: {}]
  %s1 = inlined_call_operand.hbm [shape: f32[16,128], index: 1, kind: input, shape index: {}]
  %s2 = inlined_call_operand.hbm [shape: f32[1,1], index: 2, kind: output, shape index: {}]
  %s3 = sld [smem:[#allocation0]]
  $region42: #{tpu_custom_call.1} parent=0
    _
  %s5 = ssub.s32 1, %s3
  %s6 = scalar_select 0, %s5, %s3
  $region1: #{tpu_custom_call.1} parent=0
    #allocation3 [shape = 'u8[16384]{0}', space=vmem, size = 0x4000, scoped, tag = 'input window, operand 0, single buffered']
    #allocation4 [shape = 's32[1]{0}', space=sflag, size = 0x4, scoped, tag = 'scoped memory for tpu_custom_call.1']
    #allocation5 [shape = 's32[1]{0}', space=sflag, size = 0x4, scoped, tag = 'scoped memory for tpu_custom_call.1']
    #allocation6 [shape = 'u8[16384]{0}', space=vmem, size = 0x4000, scoped, tag = 'input window, operand 1, single buffered']
    #allocation7 [shape = 's32[1]{0}', space=sflag, size = 0x4, scoped, tag = 'scoped memory for tpu_custom_call.1']
    #allocation8 [shape = 'u8[512]{0}', space=vmem, size = 0x400, scoped, tag = 'output window, operand 0, single buffered']
    %7 = vsyncpa [#allocation4], 0
    %8 = vsyncpa [#allocation7], 0
    %9 = vsyncpa [#allocation5], 0
    // Predicated region
    $region2: #{tpu_custom_call.1} parent=1 // pred_check
      _
    $region3: #{tpu_custom_call.1} parent=1 // pred_check_branch
      %11 = sbr.rel (0) target = $region5
    $region4: #{tpu_custom_call.1} parent=1 // pred_region
      %s12 = sadd.s32 0, 0
      %s13 = smul.u32 4, %s12
      %s14 = ssub.s32 2, %s13
      %s15 = smul.u32 128, %s14
      %s17 = ssub.s32 512, %s15
      %18 = vsyncadd [#allocation4], %s17
      %p19 = scmp.ne.s32.totalorder 0, %s15
      %s20 = smul.addr %s13, 128
      %s21 = scalar_lea.hbm %s0, %s20
      %s22 = smul.u32 8, %s14
      %s23 = sshll.u32 [#allocation3], 4
      %s24 = int_to_ptr.vmem [resolvable:$true] %s23
      %s25 = sshll.u32 %s22, 4
      %29 = dma.hbm_to_vmem [thread:$0]  (%p19), %s21, %s25, %s24, [#allocation4], 128, 128, 8
    $region5: #{tpu_custom_call.1} parent=1 // pred_fallthru
      _
    // Predicated region
    $region6: #{tpu_custom_call.1} parent=1 // pred_check
      _
    $region7: #{tpu_custom_call.1} parent=1 // pred_check_branch
      %31 = sbr.rel (0) target = $region9
    $region8: #{tpu_custom_call.1} parent=1 // pred_region
      %s32 = sadd.s32 0, 0
      %s33 = smul.u32 4, %s32
      %s34 = ssub.s32 2, %s33
      %s35 = smul.u32 128, %s34
      %s37 = ssub.s32 512, %s35
      %38 = vsyncadd [#allocation7], %s37
      %p39 = scmp.ne.s32.totalorder 0, %s35
      %s40 = smul.addr %s33, 128
      %s41 = scalar_lea.hbm %s1, %s40
      %s42 = smul.u32 8, %s34
      %s43 = sshll.u32 [#allocation6], 4
      %s44 = int_to_ptr.vmem [resolvable:$true] %s43
      %s45 = sshll.u32 %s42, 4
      %49 = dma.hbm_to_vmem [thread:$0]  (%p39), %s41, %s45, %s44, [#allocation7], 128, 128, 8
    $region9: #{tpu_custom_call.1} parent=1 // pred_fallthru
      _
    // Predicated region
    $region10: #{tpu_custom_call.1} parent=1 // pred_check
      _
    $region11: #{tpu_custom_call.1} parent=1 // pred_check_branch
      %51 = sbr.rel (0) target = $region13
    $region12: #{tpu_custom_call.1} parent=1 // pred_region
      %52 = dma.done [#allocation4], 512
    $region13: #{tpu_custom_call.1} parent=1 // pred_fallthru
      _
    // Predicated region
    $region14: #{tpu_custom_call.1} parent=1 // pred_check
      _
    $region15: #{tpu_custom_call.1} parent=1 // pred_check_branch
      %54 = sbr.rel (0) target = $region17
    $region16: #{tpu_custom_call.1} parent=1 // pred_region
      %55 = dma.done [#allocation7], 512
    $region17: #{tpu_custom_call.1} parent=1 // pred_fallthru
      _
    %s56 = sadd.s32 0, 0
    %s57 = smul.u32 4, %s56
    %s58 = ssub.s32 2, %s57
    %s59 = smul.u32 128, %s58
    %s60 = sadd.s32 0, 0
    %s61 = smul.u32 4, %s60
    %s62 = ssub.s32 2, %s61
    %s63 = smul.u32 128, %s62
    %p64 = scmp.eq.s32.totalorder 0, 0
    // Predicated region
    $region18: #{tpu_custom_call.1} parent=1 // pred_check
      %p65 = pneg %p64
    $region19: #{tpu_custom_call.1} parent=1 // pred_check_branch
      %67 = sbr.rel (%p65) target = $region21
    $region20: #{tpu_custom_call.1} parent=1 // pred_region
      %68 = vst [vmem:[#allocation2] sm:$0xff] 0.0
      %69 = vst [vmem:[#allocation2 + $0x8] sm:$0xff] 0.0
      %70 = vst [vmem:[#allocation2 + $0x10] sm:$0xff] 0.0
      %71 = vst [vmem:[#allocation2 + $0x18] sm:$0xff] 0.0
    $region21: #{tpu_custom_call.1} parent=1 // pred_fallthru
      _
    %v72 = vld [vmem:[#allocation3] sm:$0xff]
    %v73 = vld [vmem:[#allocation3 + $0x8] sm:$0xff]
    %v74 = vld [vmem:[#allocation3 + $0x10] sm:$0xff]
    %v75 = vld [vmem:[#allocation3 + $0x18] sm:$0xff]
    %v76 = vld [vmem:[#allocation6] sm:$0xff]
    %v77 = vld [vmem:[#allocation6 + $0x8] sm:$0xff]
    %v78 = vld [vmem:[#allocation6 + $0x10] sm:$0xff]
    %v79 = vld [vmem:[#allocation6 + $0x18] sm:$0xff]
    %v80 = vand.u32 2147483647, %v72
    %v81 = vand.u32 2147483647, %v73
    %v82 = vand.u32 2147483647, %v74
    %v83 = vand.u32 2147483647, %v75
    %v84 = vsub.f32 0.0, %v80
    %v85 = vsub.f32 0.0, %v81
    %v86 = vsub.f32 0.0, %v82
    %v87 = vsub.f32 0.0, %v83
    %v88 = vmul.f32 %v84, 1.442695
    %v89 = vpow.pop %v88
    %v90 = vmul.f32 %v85, 1.442695
    %v91 = vpow.pop %v90
    %v92 = vmul.f32 %v86, 1.442695
    %v93 = vpow.pop %v92
    %v94 = vmul.f32 %v87, 1.442695
    %v95 = vpow.pop %v94
    %v96 = vadd.f32 %v89, 1.0
    %v97 = vlog2.pop %v96
    %v98 = vmul.f32 %v97, 0.6931472
    %v99 = vmul.f32 -0.5, %v89
    %v100 = vadd.f32 %v99, 1.0
    %v101 = vmul.f32 %v100, %v89
    %v102 = vand.u32 2147483647, %v89
    %vm103 = vcmp.lt.f32.partialorder %v102, 0.0004427343
    %v104 = vsel %vm103, %v101, %v98
    %v105 = vadd.f32 %v91, 1.0
    %v106 = vlog2.pop %v105
    %v107 = vmul.f32 %v106, 0.6931472
    %v108 = vmul.f32 -0.5, %v91
    %v109 = vadd.f32 %v108, 1.0
    %v110 = vmul.f32 %v109, %v91
    %v111 = vand.u32 2147483647, %v91
    %vm112 = vcmp.lt.f32.partialorder %v111, 0.0004427343
    %v113 = vsel %vm112, %v110, %v107
    %v114 = vadd.f32 %v93, 1.0
    %v115 = vlog2.pop %v114
    %v116 = vmul.f32 %v115, 0.6931472
    %v117 = vmul.f32 -0.5, %v93
    %v118 = vadd.f32 %v117, 1.0
    %v119 = vmul.f32 %v118, %v93
    %v120 = vand.u32 2147483647, %v93
    %vm121 = vcmp.lt.f32.partialorder %v120, 0.0004427343
    %v122 = vsel %vm121, %v119, %v116
    %v123 = vadd.f32 %v95, 1.0
    %v124 = vlog2.pop %v123
    %v125 = vmul.f32 %v124, 0.6931472
    %v126 = vmul.f32 -0.5, %v95
    %v127 = vadd.f32 %v126, 1.0
    %v128 = vmul.f32 %v127, %v95
    %v129 = vand.u32 2147483647, %v95
    %vm130 = vcmp.lt.f32.partialorder %v129, 0.0004427343
    %v131 = vsel %vm130, %v128, %v125
    %v132 = vmin.f32 %v72, 0.0
    %v133 = vmin.f32 %v73, 0.0
    %v134 = vmin.f32 %v74, 0.0
    %v135 = vmin.f32 %v75, 0.0
    %v136 = vsub.f32 %v132, %v104
    %v137 = vsub.f32 %v133, %v113
    %v138 = vsub.f32 %v134, %v122
    %v139 = vsub.f32 %v135, %v131
    %v140 = vsub.f32 %v136, %v72
    %v141 = vsub.f32 %v137, %v73
    %v142 = vsub.f32 %v138, %v74
    %v143 = vsub.f32 %v139, %v75
    %v144 = vmul.f32 %v136, 1.442695
    %v145 = vpow.pop %v144
    %v146 = vmul.f32 %v137, 1.442695
    %v147 = vpow.pop %v146
    %v148 = vmul.f32 %v138, 1.442695
    %v149 = vpow.pop %v148
    %v150 = vmul.f32 %v139, 1.442695
    %v151 = vpow.pop %v150
    %v152 = vsub.f32 %v76, %v145
    %v153 = vsub.f32 %v77, %v147
    %v154 = vsub.f32 %v78, %v149
    %v155 = vsub.f32 %v79, %v151
    %v156 = vmul.f32 %v152, %v152
    %v157 = vmul.f32 %v153, %v153
    %v158 = vmul.f32 %v154, %v154
    %v159 = vmul.f32 %v155, %v155
    %v160 = vsub.f32 0.0, %v156
    %v161 = vsub.f32 0.0, %v157
    %v162 = vsub.f32 0.0, %v158
    %v163 = vsub.f32 0.0, %v159
    %v164 = vmul.f32 %v76, 0.5
    %v165 = vmul.f32 %v77, 0.5
    %v166 = vmul.f32 %v78, 0.5
    %v167 = vmul.f32 %v79, 0.5
    %v168 = vmul.f32 %v164, %v136
    %v169 = vmul.f32 %v165, %v137
    %v170 = vmul.f32 %v166, %v138
    %v171 = vmul.f32 %v167, %v139
    %v172 = vsub.f32 1.0, %v76
    %v173 = vsub.f32 1.0, %v77
    %v174 = vsub.f32 1.0, %v78
    %v175 = vsub.f32 1.0, %v79
    %v176 = vmul.f32 %v172, 0.5
    %v177 = vmul.f32 %v173, 0.5
    %v178 = vmul.f32 %v174, 0.5
    %v179 = vmul.f32 %v175, 0.5
    %v180 = vmul.f32 %v176, %v140
    %v181 = vmul.f32 %v177, %v141
    %v182 = vmul.f32 %v178, %v142
    %v183 = vmul.f32 %v179, %v143
    %v184 = vadd.f32 %v168, %v180
    %v185 = vadd.f32 %v169, %v181
    %v186 = vadd.f32 %v170, %v182
    %v187 = vadd.f32 %v171, %v183
    %v188 = vmul.f32 %v184, %v160
    %v189 = vmul.f32 %v185, %v161
    %v190 = vmul.f32 %v186, %v162
    %v191 = vmul.f32 %v187, %v163
    %s192 = sadd.s32 0, 0
    %p193 = scmp.ge.s32.totalorder %s192, 0
    // Predicated region
    $region22: #{tpu_custom_call.1} parent=1 // pred_check
      %p194 = pneg %p193
    $region23: #{tpu_custom_call.1} parent=1 // pred_check_branch
      %196 = sbr.rel (%p194) target = $region25
    $region24: #{tpu_custom_call.1} parent=1 // pred_region
      %v197 = vlaneseq
      %v198 = vshrl.u32 %v197, 7
      %v199 = vadd.s32 %v198, 8
      %v200 = vadd.s32 %v198, 16
      %v201 = vadd.s32 %v198, 24
      %s202 = smul.u32 %s192, 32
      %v203 = vstv %s202
      %v204 = vadd.s32 %v203, %v198
      %v205 = vadd.s32 %v203, %v199
      %v206 = vadd.s32 %v203, %v200
      %v207 = vadd.s32 %v203, %v201
      %vm208 = vcmp.lt.s32.totalorder %v204, 16
      %vm209 = vcmp.lt.s32.totalorder %v205, 16
      %vm210 = vcmp.lt.s32.totalorder %v206, 16
      %vm211 = vcmp.lt.s32.totalorder %v207, 16
      %v212 = vsel %vm208, %v188, 0.0
      %v213 = vsel %vm209, %v189, 0.0
      %v214 = vsel %vm210, %v190, 0.0
      %v215 = vsel %vm211, %v191, 0.0
      %v216 = vadd.f32 %v212, 0.0
      %v217 = vadd.f32 %v213, 0.0
      %v218 = vadd.f32 %v214, 0.0
      %v219 = vadd.f32 %v215, 0.0
      %v220 = vld [vmem:[#allocation2] sm:$0xff]
      %v221 = vld [vmem:[#allocation2 + $0x8] sm:$0xff]
      %v222 = vld [vmem:[#allocation2 + $0x10] sm:$0xff]
      %v223 = vld [vmem:[#allocation2 + $0x18] sm:$0xff]
      %v224 = vadd.f32 %v220, %v216
      %v225 = vadd.f32 %v221, %v217
      %v226 = vadd.f32 %v222, %v218
      %v227 = vadd.f32 %v223, %v219
      %228 = vst [vmem:[#allocation2] sm:$0xff] %v224
      %229 = vst [vmem:[#allocation2 + $0x8] sm:$0xff] %v225
      %230 = vst [vmem:[#allocation2 + $0x10] sm:$0xff] %v226
      %231 = vst [vmem:[#allocation2 + $0x18] sm:$0xff] %v227
    $region25: #{tpu_custom_call.1} parent=1 // pred_fallthru
      _
    %p232 = scmp.lt.s32.totalorder %s192, 0
    // Predicated region
    $region26: #{tpu_custom_call.1} parent=1 // pred_check
      %p233 = pneg %p232
    $region27: #{tpu_custom_call.1} parent=1 // pred_check_branch
      %235 = sbr.rel (%p233) target = $region29
    $region28: #{tpu_custom_call.1} parent=1 // pred_region
      %v236 = vadd.f32 %v188, 0.0
      %v237 = vadd.f32 %v189, 0.0
      %v238 = vadd.f32 %v190, 0.0
      %v239 = vadd.f32 %v191, 0.0
      %v240 = vld [vmem:[#allocation2] sm:$0xff]
      %v241 = vld [vmem:[#allocation2 + $0x8] sm:$0xff]
      %v242 = vld [vmem:[#allocation2 + $0x10] sm:$0xff]
      %v243 = vld [vmem:[#allocation2 + $0x18] sm:$0xff]
      %v244 = vadd.f32 %v240, %v236
      %v245 = vadd.f32 %v241, %v237
      %v246 = vadd.f32 %v242, %v238
      %v247 = vadd.f32 %v243, %v239
      %248 = vst [vmem:[#allocation2] sm:$0xff] %v244
      %249 = vst [vmem:[#allocation2 + $0x8] sm:$0xff] %v245
      %250 = vst [vmem:[#allocation2 + $0x10] sm:$0xff] %v246
      %251 = vst [vmem:[#allocation2 + $0x18] sm:$0xff] %v247
    $region29: #{tpu_custom_call.1} parent=1 // pred_fallthru
      _
    // Predicated region
    $region30: #{tpu_custom_call.1} parent=1 // pred_check
      %p252 = pneg %p64
    $region31: #{tpu_custom_call.1} parent=1 // pred_check_branch
      %254 = sbr.rel (%p252) target = $region33
    $region32: #{tpu_custom_call.1} parent=1 // pred_region
      %v255 = vld [vmem:[#allocation2] sm:$0xff]
      %v256 = vld [vmem:[#allocation2 + $0x8] sm:$0xff]
      %v257 = vld [vmem:[#allocation2 + $0x10] sm:$0xff]
      %v258 = vld [vmem:[#allocation2 + $0x18] sm:$0xff]
      %v259 = vadd.f32 %v255, %v256
      %v260 = vadd.f32 %v259, %v257
      %v261 = vadd.f32 %v260, %v258
      %262 = vadd.xlane.f32.xlu0 %v261
      %v263 = vpop.xlane.xlu0 %262
      %v264 = vrot.slane %v263, 4
      %v265 = vadd.f32 %v263, %v264
      %v266 = vrot.slane %v265, 2
      %v267 = vadd.f32 %v265, %v266
      %v268 = vrot.slane %v267, 1
      %v269 = vadd.f32 %v267, %v268
      %s270 = vtos %v269
      %v271 = vstv %s270
      %vm272 = vcmask 0
      %273 = vst.msk [vmem:[#allocation8] sm:$0x1] %vm272, %v271
    $region33: #{tpu_custom_call.1} parent=1 // pred_fallthru
      _
    // Predicated region
    $region34: #{tpu_custom_call.1} parent=1 // pred_check
      _
    $region35: #{tpu_custom_call.1} parent=1 // pred_check_branch
      %275 = sbr.rel (0) target = $region37
    $region36: #{tpu_custom_call.1} parent=1 // pred_region
      %s277 = ssub.s32 16, 16
      %278 = vsyncadd [#allocation5], %s277
      %s280 = sshll.u32 [#allocation8], 4
      %s281 = int_to_ptr.vmem [resolvable:$true] %s280
      %283 = dma.vmem_to_hbm [thread:$0]  %s281, 16, %s2, [#allocation5]
    $region37: #{tpu_custom_call.1} parent=1 // pred_fallthru
      _
    // Predicated region
    $region38: #{tpu_custom_call.1} parent=1 // pred_check
      _
    $region39: #{tpu_custom_call.1} parent=1 // pred_check_branch
      %285 = sbr.rel (0) target = $region41
    $region40: #{tpu_custom_call.1} parent=1 // pred_region
      %286 = dma.done [#allocation5], 16
    $region41: #{tpu_custom_call.1} parent=1 // pred_fallthru
      _
    %287 = vsyncpa [#allocation4], 1
    %288 = vsyncpa [#allocation7], 1
    %289 = vsyncpa [#allocation5], 1

</llo_original>
